<compile_context>
chip_gen: v7x
topology: tpu7x:2x2x1
jax: 0.10.0
libtpu: 0.0.40
codegen_flags: <defaults>
</compile_context>

<pallas_src>
import functools

import jax
import jax.numpy as jnp
from jax.experimental import pallas as pl
from jax.experimental.pallas import tpu as pltpu


def prop_kernel(x_ref, p_ref, wk_ref, b_ref, o_ref):
    """One batch block per grid step.

    x_ref : (1, V, B*C*L)        node-major input slab, lanes = (b, c, l)
    p_ref : (V, V)               precomputed propagation polynomial P
    wk_ref: (B*C*L, B*c_out*L)   1x1 conv as a right-multiply (kron form)
    b_ref : (1, B*c_out*L)       bias, pre-broadcast over (sample, time)
    o_ref : (1, V, B*c_out*L)    node-major output slab
    """
    # Graph propagation collapsed into ONE MXU matmul: h = P @ x.
    h = jnp.dot(p_ref[...], x_ref[0], preferred_element_type=jnp.float32)
    # 1x1 conv (channel mixing) as a second MXU matmul + broadcast bias add.
    out = (
        jnp.dot(h.astype(wk_ref.dtype), wk_ref[...],
                preferred_element_type=jnp.float32)
        + b_ref[...]
    )
    o_ref[0] = out.astype(o_ref.dtype)


def _auto_batch_block(N, C, c_out, L):
    """Smallest divisor B of N whose output lane width B*c_out*L is a multiple
    of 128 (lane-dense stores), capped so the O(B^2) kron Wk stays tiny.
    Smallest such B keeps the most grid steps for v7x's two TensorCores."""
    candidates = [
        b for b in range(1, N + 1)
        if N % b == 0 and b * max(C, c_out) * L <= 512
    ]
    if not candidates:
        return 1
    for b in candidates:
        if (b * c_out * L) % 128 == 0:
            return b
    return candidates[-1]


def prop_forward(x, adj, weight, bias, *, gdep, alpha,
                 batch_block=None, compute_dtype=None):
    """x: (N, C, V, L), adj: (V, V), weight: (c_out, C, 1, 1), bias: (c_out,)."""
    N, C, V, L = x.shape
    c_out = weight.shape[0]
    out_dtype = x.dtype
    cdt = x.dtype if compute_dtype is None else compute_dtype

    B = _auto_batch_block(N, C, c_out, L) if batch_block is None else batch_block
    if N % B != 0:
        raise ValueError(f"batch_block={B} must divide N={N}")
    G = N // B

    # ---- grid-invariant preprocessing (plain JAX, hoisted out of the kernel) --
    # Row-normalized adjacency (adj + I guarantees rowsum >= 1 for non-neg adj).
    a = adj.astype(jnp.float32) + jnp.eye(V, dtype=jnp.float32)
    a = a / jnp.sum(a, axis=1, keepdims=True)

    # Propagation polynomial: h_gdep = P @ x with
    #   P_{k+1} = alpha*I + (1-alpha)*a @ P_k,  P_0 = I.
    eye_v = jnp.eye(V, dtype=jnp.float32)
    m = (1.0 - alpha) * a
    p = eye_v
    for _ in range(gdep):  # gdep-1 tiny (V,V) matmuls, done once, outside kernel
        p = alpha * eye_v + jnp.dot(m, p, precision=jax.lax.Precision.HIGHEST)

    # Node-major, lane-dense input slab: (N,C,V,L) -> (G, V, B*C*L), lanes (b,c,l).
    x_v = (
        x.reshape(G, B, C, V, L)
        .transpose(0, 3, 1, 2, 4)
        .reshape(G, V, B * C * L)
    )

    # 1x1 conv as a right-multiply:
    #   Wk[c*L + l', o*L + l] = w[o, c] * (l' == l);  block-diagonal over B samples.
    w2 = weight.reshape(c_out, C).astype(jnp.float32)
    eye_l = jnp.eye(L, dtype=jnp.float32)
    wk = (w2.T[:, None, :, None] * eye_l[None, :, None, :]).reshape(
        C * L, c_out * L
    )
    wk_b = jnp.kron(jnp.eye(B, dtype=jnp.float32), wk)   # (B*C*L, B*c_out*L)

    # Bias pre-broadcast to the output lane layout (b, c_out, l).
    b_row = jnp.tile(jnp.repeat(bias.astype(jnp.float32), L), B)[None, :]

    # Optional bf16 operands (v6e/v7x MXU is bf16-native); accumulate in f32.
    x_v = x_v.astype(cdt)
    p = p.astype(cdt)
    wk_b = wk_b.astype(cdt)
    b_row = b_row.astype(cdt)

    # Advisory cost (MXU executes the structural zeros of the kron form too).
    flops = 2 * G * V * V * (B * C * L) + 2 * G * V * (B * C * L) * (B * c_out * L)
    in_isz = jnp.dtype(cdt).itemsize
    bytes_accessed = (
        in_isz * (N * C * V * L + V * V
                  + (B * C * L) * (B * c_out * L) + B * c_out * L)
        + jnp.dtype(out_dtype).itemsize * N * c_out * V * L
    )

    out_v = pl.pallas_call(
        prop_kernel,
        out_shape=jax.ShapeDtypeStruct((G, V, B * c_out * L), out_dtype),
        grid=(G,),
        in_specs=[
            pl.BlockSpec((1, V, B * C * L), lambda g: (g, 0, 0)),
            pl.BlockSpec((V, V), lambda g: (0, 0)),
            pl.BlockSpec((B * C * L, B * c_out * L), lambda g: (0, 0)),
            pl.BlockSpec((1, B * c_out * L), lambda g: (0, 0)),
        ],
        out_specs=pl.BlockSpec((1, V, B * c_out * L), lambda g: (g, 0, 0)),
        compiler_params=pltpu.CompilerParams(
            dimension_semantics=("parallel",)
        ),
        cost_estimate=pl.CostEstimate(
            flops=flops, transcendentals=0, bytes_accessed=bytes_accessed
        ),
    )(x_v, p, wk_b, b_row)

    # Back to NCHW: (G, V, B*c_out*L) -> (N, c_out, V, L).
    out = (
        out_v.reshape(G, V, B, c_out, L)
        .transpose(0, 2, 3, 1, 4)
        .reshape(N, c_out, V, L)
    )
    return out


def prop_reference(x, adj, weight, bias, *, gdep, alpha):
    """Pure-JAX reference matching the PyTorch forward exactly."""
    V = adj.shape[0]
    adj = adj + jnp.eye(V, dtype=adj.dtype)
    d = adj.sum(1)
    a = adj / d[:, None]
    h = x
    for _ in range(gdep):
        h = alpha * x + (1 - alpha) * jnp.einsum("ncwl,vw->ncvl", h, a)
    w2 = weight.reshape(weight.shape[0], weight.shape[1])
    ho = jnp.einsum("oc,ncvl->novl", w2, h) + bias[None, :, None, None]
    return ho


if __name__ == "__main__":
    # Shapes implied by the module:
    # x: (batch, c_in, num_nodes, time_steps), adj: (num_nodes, num_nodes)
    N, C_IN, C_OUT, V, L = 2, 4, 8, 16, 8
    GDEP, ALPHA = 2, 0.05

    key = jax.random.PRNGKey(0)
    kx, ka, kw, kb = jax.random.split(key, 4)
    x = jax.random.normal(kx, (N, C_IN, V, L), dtype=jnp.float32)
    adj = jax.random.uniform(ka, (V, V), dtype=jnp.float32)   # non-negative adjacency
    weight = 0.1 * jax.random.normal(kw, (C_OUT, C_IN, 1, 1), dtype=jnp.float32)
    bias = 0.1 * jax.random.normal(kb, (C_OUT,), dtype=jnp.float32)

    ref = prop_reference(x, adj, weight, bias, gdep=GDEP, alpha=ALPHA)

    # batch_block=1: 2 grid steps (one per TensorCore on v7x), 64-lane output.
    out1 = jax.block_until_ready(
        prop_forward(x, adj, weight, bias, gdep=GDEP, alpha=ALPHA, batch_block=1)
    )
    assert out1.shape == (N, C_OUT, V, L)
    assert jnp.allclose(out1, ref, rtol=1e-4, atol=1e-4), (
        f"max abs err (B=1) = {jnp.max(jnp.abs(out1 - ref))}"
    )

    # Auto batch_block: picks B=2 here -> 128-lane (lane-dense) output, single
    # grid step (v5e/v6e optimum: fewest fixed-overhead steps).
    out2 = jax.block_until_ready(
        prop_forward(x, adj, weight, bias, gdep=GDEP, alpha=ALPHA)
    )
    assert jnp.allclose(out2, ref, rtol=1e-4, atol=1e-4), (
        f"max abs err (auto B) = {jnp.max(jnp.abs(out2 - ref))}"
    )

    # bf16 operands (v6e/v7x path), f32 accumulation — loose tolerance.
    out3 = jax.block_until_ready(
        prop_forward(x, adj, weight, bias, gdep=GDEP, alpha=ALPHA,
                     batch_block=2, compute_dtype=jnp.bfloat16)
    )
    assert jnp.allclose(out3, ref, rtol=8e-2, atol=8e-2), (
        f"max abs err (bf16) = {jnp.max(jnp.abs(out3 - ref))}"
    )

    print("KERNEL_OK")
</pallas_src>

<mosaic_0001>
module attributes {stable_mosaic.version = 11 : i64} {
  func.func @prop_kernel(%arg0: i32, %arg1: memref<1x16x32xf32, #tpu.memory_space<vmem>>, %arg2: memref<16x16xf32, #tpu.memory_space<vmem>>, %arg3: memref<32x64xf32, #tpu.memory_space<vmem>>, %arg4: memref<1x64xf32, #tpu.memory_space<vmem>>, %arg5: memref<1x16x64xf32, #tpu.memory_space<vmem>>) attributes {dimension_semantics = [#tpu.dimension_semantics<parallel>], iteration_bounds = array<i64: 2>, scalar_prefetch = 0 : i64, scratch_operands = 0 : i64, tpu.core_type = #tpu.core_type<tc>, window_params = [{transform_indices = @transform_0, window_bounds = array<i64: 1, 16, 32>}, {pipeline_mode = #tpu.pipeline_mode<synchronous>, transform_indices = @transform_1, window_bounds = array<i64: 16, 16>}, {pipeline_mode = #tpu.pipeline_mode<synchronous>, transform_indices = @transform_2, window_bounds = array<i64: 32, 64>}, {pipeline_mode = #tpu.pipeline_mode<synchronous>, transform_indices = @transform_3, window_bounds = array<i64: 1, 64>}, {transform_indices = @transform_4, window_bounds = array<i64: 1, 16, 64>}]} {
    %c0 = arith.constant 0 : index
    %c0_0 = arith.constant 0 : index
    %0 = vector.load %arg2[%c0, %c0_0] : memref<16x16xf32, #tpu.memory_space<vmem>>, vector<16x16xf32>
    %c0_1 = arith.constant 0 : index
    %c0_2 = arith.constant 0 : index
    %c0_3 = arith.constant 0 : index
    %1 = vector.load %arg1[%c0_1, %c0_2, %c0_3] : memref<1x16x32xf32, #tpu.memory_space<vmem>>, vector<1x16x32xf32>
    %2 = vector.shape_cast %1 : vector<1x16x32xf32> to vector<16x32xf32>
    %cst = arith.constant dense<0.000000e+00> : vector<16x32xf32>
    %3 = tpu.matmul %0, %2, %cst {dimension_numbers = #tpu.dot_dimension_numbers<[1], [0], [0], [1], [0, 0, 1, 1], [], []>} : vector<16x16xf32>, vector<16x32xf32>, vector<16x32xf32> -> vector<16x32xf32>
    %c0_4 = arith.constant 0 : index
    %c0_5 = arith.constant 0 : index
    %4 = vector.load %arg3[%c0_4, %c0_5] : memref<32x64xf32, #tpu.memory_space<vmem>>, vector<32x64xf32>
    %cst_6 = arith.constant dense<0.000000e+00> : vector<16x64xf32>
    %5 = tpu.matmul %3, %4, %cst_6 {dimension_numbers = #tpu.dot_dimension_numbers<[1], [0], [0], [1], [0, 0, 1, 1], [], []>} : vector<16x32xf32>, vector<32x64xf32>, vector<16x64xf32> -> vector<16x64xf32>
    %c0_7 = arith.constant 0 : index
    %c0_8 = arith.constant 0 : index
    %6 = vector.load %arg4[%c0_7, %c0_8] : memref<1x64xf32, #tpu.memory_space<vmem>>, vector<1x64xf32>
    %7 = vector.broadcast %6 : vector<1x64xf32> to vector<16x64xf32>
    %8 = arith.addf %5, %7 : vector<16x64xf32>
    %c0_9 = arith.constant 0 : index
    %c0_10 = arith.constant 0 : index
    %c0_11 = arith.constant 0 : index
    %9 = vector.load %arg5[%c0_9, %c0_10, %c0_11] : memref<1x16x64xf32, #tpu.memory_space<vmem>>, vector<1x16x64xf32>
    %10 = vector.shape_cast %9 : vector<1x16x64xf32> to vector<16x64xf32>
    %11 = vector.shape_cast %8 : vector<16x64xf32> to vector<1x16x64xf32>
    tpu.vector_store %arg5[%c0_9, %c0_10, %c0_11], %11 {strides = array<i32>} : memref<1x16x64xf32, #tpu.memory_space<vmem>>, vector<1x16x64xf32>,
    return
  }
  func.func @transform_0(%arg0: i32) -> (i32, i32, i32) {
    %c0_i32 = arith.constant 0 : i32
    %c0_i32_0 = arith.constant 0 : i32
    %c0_i32_1 = arith.constant 0 : i32
    return %arg0, %c0_i32, %c0_i32_0 : i32, i32, i32
  }
  func.func @transform_1(%arg0: i32) -> (i32, i32) {
    %c0_i32 = arith.constant 0 : i32
    %c0_i32_0 = arith.constant 0 : i32
    %c0_i32_1 = arith.constant 0 : i32
    return %c0_i32, %c0_i32_0 : i32, i32
  }
  func.func @transform_2(%arg0: i32) -> (i32, i32) {
    %c0_i32 = arith.constant 0 : i32
    %c0_i32_0 = arith.constant 0 : i32
    %c0_i32_1 = arith.constant 0 : i32
    return %c0_i32, %c0_i32_0 : i32, i32
  }
  func.func @transform_3(%arg0: i32) -> (i32, i32) {
    %c0_i32 = arith.constant 0 : i32
    %c0_i32_0 = arith.constant 0 : i32
    %c0_i32_1 = arith.constant 0 : i32
    return %c0_i32, %c0_i32_0 : i32, i32
  }
  func.func @transform_4(%arg0: i32) -> (i32, i32, i32) {
    %c0_i32 = arith.constant 0 : i32
    %c0_i32_0 = arith.constant 0 : i32
    %c0_i32_1 = arith.constant 0 : i32
    return %arg0, %c0_i32, %c0_i32_0 : i32, i32, i32
  }
}

</mosaic_0001>

<llo_original>
// kernel: tpu_custom_call.1
$region0: #{tpu_custom_call.1}
  #allocation0 [shape = 'u32[]', space=smem, size = 0x4, offset = 0x4, fixed_abs, tag = 'smem constant byte address 0x4 - core index']
  #allocation1 [shape = 'u32[144,128]{1,0:T(1,128)}', space=vmem, size = 0x12000, scoped, tag = 'internal scratch']
  %s0 = inlined_call_operand.hbm [shape: f32[2,16,32], index: 0, kind: input, shape index: {}]
  %s1 = inlined_call_operand.hbm [shape: f32[16,16], index: 1, kind: input, shape index: {}]
  %s2 = inlined_call_operand.hbm [shape: f32[32,64], index: 2, kind: input, shape index: {}]
  %s3 = inlined_call_operand.vmem [shape: f32[1,64], index: 3, kind: input, shape index: {}]
  %s4 = inlined_call_operand.hbm [shape: f32[2,16,64], index: 4, kind: output, shape index: {}]
  %s5 = sld [smem:[#allocation0]]
  $region61: #{tpu_custom_call.1} parent=0
    _
  %s7 = ssub.s32 1, %s5
  %s8 = scalar_select 0, %s7, %s5
  $region1: #{tpu_custom_call.1} parent=0
    #allocation2 [shape = 'u8[16384]{0}', space=vmem, size = 0x4000, scoped, tag = 'input window, operand 0']
    #allocation3 [shape = 's32[2]{0}', space=sflag, size = 0x8, scoped, tag = 'scoped memory for tpu_custom_call.1']
    #allocation4 [shape = 's32[2]{0}', space=sflag, size = 0x8, scoped, tag = 'scoped memory for tpu_custom_call.1']
    #allocation5 [shape = 'u8[8192]{0}', space=vmem, size = 0x2000, scoped, tag = 'input window, operand 1, single buffered']
    #allocation6 [shape = 's32[1]{0}', space=sflag, size = 0x4, scoped, tag = 'scoped memory for tpu_custom_call.1']
    #allocation7 [shape = 'u8[16384]{0}', space=vmem, size = 0x4000, scoped, tag = 'input window, operand 2, single buffered']
    #allocation8 [shape = 'u8[16384]{0}', space=vmem, size = 0x4000, scoped, tag = 'output window, operand 0']
    %9 = vsyncpa [#allocation3], 0
    %s10 = scalar_lea.sflag [#allocation3], 1
    %11 = vsyncpa %s10, 0
    %12 = vsyncpa [#allocation6], 0
    %13 = vsyncpa [#allocation4], 0
    %s14 = scalar_lea.sflag [#allocation4], 1
    %15 = vsyncpa %s14, 0
    loop: start=0, step=1, limit=4
    $region2: #{tpu_custom_call.1} parent=1 // loop_pre_header
      _
    $region3: #{tpu_custom_call.1} parent=1 // loop_header
      %s17 = sphi 0, %s21
      %p18 = scmp.ge.s32.totalorder %s17, 4
      %s27 = sphi 0, %s29
      %s30 = sphi 0, %s27
      %s31 = sphi 0, %s30
      %s47 = sphi 0, %s31
      %s51 = sphi 0, %s51
      %s53 = sphi 0, %s51
      %s54 = sphi 0, %s53
      %s68 = sphi 0, %s54
      %s72 = sphi 0, %s72
      %s74 = sphi 0, %s72
      %s75 = sphi 0, %s74
      %s89 = sphi 0, %s75
      %s93 = sphi 0, %s93
      %s95 = sphi 0, %s93
      %s96 = sphi 0, %s95
      %s110 = sphi 0, %s96
      %s116 = sphi 0, %s118
      %s119 = sphi 0, %s116
      %s120 = sphi 0, %s119
      %s136 = sphi 0, %s120
    $region4: #{tpu_custom_call.1} parent=1 // loop_header_branch
      %20 = sbr.rel (%p18) target = $region8
    $region5: #{tpu_custom_call.1} parent=1 // loop_body
      %s22 = ssub.s32 %s17, 1
      %s23 = ssub.s32 %s17, 2
      %s24 = sadd.s32 %s17, 1
      %s25 = ssub.s32 %s17, %s24
      %p26 = scmp.eq.s32.totalorder %s25, 0
      %s28 = sadd.s32 %s27, 1
      %s29 = scalar_select %p26, %s27, %s28
      %p32 = pneg %p26
      %p33 = scmp.eq.s32.totalorder %s17, 1
      %p34 = por %p32, %p33
      %p35 = scmp.ne.s32.totalorder %s27, %s30
      %p36 = scmp.eq.s32.totalorder %s17, 0
      %p37 = por %p35, %p36
      %p38 = scmp.ne.s32.totalorder %s27, %s30
      %p39 = scmp.eq.s32.totalorder %s22, 1
      %p40 = por %p38, %p39
      %p41 = scmp.ne.s32.totalorder %s30, %s31
      %p42 = scmp.eq.s32.totalorder %s22, 0
      %p43 = por %p41, %p42
      %p44 = scmp.ne.s32.totalorder %s30, %s31
      %p45 = scmp.eq.s32.totalorder %s23, 1
      %p46 = por %p44, %p45
      %p48 = scmp.ne.s32.totalorder %s31, %s47
      %p49 = scmp.eq.s32.totalorder %s23, 0
      %p50 = por %p48, %p49
      %s52 = sadd.s32 %s51, 1
      %p55 = scmp.eq.s32.totalorder %s17, 1
      %p56 = scmp.ne.s32.totalorder %s51, %s53
      %p57 = scmp.eq.s32.totalorder %s17, 0
      %p58 = por %p56, %p57
      %p59 = scmp.ne.s32.totalorder %s51, %s53
      %p60 = scmp.eq.s32.totalorder %s22, 1
      %p61 = por %p59, %p60
      %p62 = scmp.ne.s32.totalorder %s53, %s54
      %p63 = scmp.eq.s32.totalorder %s22, 0
      %p64 = por %p62, %p63
      %p65 = scmp.ne.s32.totalorder %s53, %s54
      %p66 = scmp.eq.s32.totalorder %s23, 1
      %p67 = por %p65, %p66
      %p69 = scmp.ne.s32.totalorder %s54, %s68
      %p70 = scmp.eq.s32.totalorder %s23, 0
      %p71 = por %p69, %p70
      %s73 = sadd.s32 %s72, 1
      %p76 = scmp.eq.s32.totalorder %s17, 1
      %p77 = scmp.ne.s32.totalorder %s72, %s74
      %p78 = scmp.eq.s32.totalorder %s17, 0
      %p79 = por %p77, %p78
      %p80 = scmp.ne.s32.totalorder %s72, %s74
      %p81 = scmp.eq.s32.totalorder %s22, 1
      %p82 = por %p80, %p81
      %p83 = scmp.ne.s32.totalorder %s74, %s75
      %p84 = scmp.eq.s32.totalorder %s22, 0
      %p85 = por %p83, %p84
      %p86 = scmp.ne.s32.totalorder %s74, %s75
      %p87 = scmp.eq.s32.totalorder %s23, 1
      %p88 = por %p86, %p87
      %p90 = scmp.ne.s32.totalorder %s75, %s89
      %p91 = scmp.eq.s32.totalorder %s23, 0
      %p92 = por %p90, %p91
      %s94 = sadd.s32 %s93, 1
      %p97 = scmp.eq.s32.totalorder %s17, 1
      %p98 = scmp.ne.s32.totalorder %s93, %s95
      %p99 = scmp.eq.s32.totalorder %s17, 0
      %p100 = por %p98, %p99
      %p101 = scmp.ne.s32.totalorder %s93, %s95
      %p102 = scmp.eq.s32.totalorder %s22, 1
      %p103 = por %p101, %p102
      %p104 = scmp.ne.s32.totalorder %s95, %s96
      %p105 = scmp.eq.s32.totalorder %s22, 0
      %p106 = por %p104, %p105
      %p107 = scmp.ne.s32.totalorder %s95, %s96
      %p108 = scmp.eq.s32.totalorder %s23, 1
      %p109 = por %p107, %p108
      %p111 = scmp.ne.s32.totalorder %s96, %s110
      %p112 = scmp.eq.s32.totalorder %s23, 0
      %p113 = por %p111, %p112
      %s114 = ssub.s32 %s17, %s24
      %p115 = scmp.eq.s32.totalorder %s114, 0
      %s117 = sadd.s32 %s116, 1
      %s118 = scalar_select %p115, %s116, %s117
      %p121 = pneg %p115
      %p122 = scmp.eq.s32.totalorder %s17, 1
      %p123 = por %p121, %p122
      %p124 = scmp.ne.s32.totalorder %s116, %s119
      %p125 = scmp.eq.s32.totalorder %s17, 0
      %p126 = por %p124, %p125
      %p127 = scmp.ne.s32.totalorder %s116, %s119
      %p128 = scmp.eq.s32.totalorder %s22, 1
      %p129 = por %p127, %p128
      %p130 = scmp.ne.s32.totalorder %s119, %s120
      %p131 = scmp.eq.s32.totalorder %s22, 0
      %p132 = por %p130, %p131
      %p133 = scmp.ne.s32.totalorder %s119, %s120
      %p134 = scmp.eq.s32.totalorder %s23, 1
      %p135 = por %p133, %p134
      %p137 = scmp.ne.s32.totalorder %s120, %s136
      %p138 = scmp.eq.s32.totalorder %s23, 0
      %p139 = por %p137, %p138
      %p140 = scmp.le.s32.totalorder 1, %s17
      %p141 = scmp.lt.s32.totalorder %s17, 3
      %p142 = pnand %p140, %p141
      %p143 = pneg %p142
      // Predicated region
      $region9: #{tpu_custom_call.1} parent=5 // pred_check
        _
      $region10: #{tpu_custom_call.1} parent=5 // pred_check_branch
        %145 = sbr.rel (%p142) target = $region12
      $region11: #{tpu_custom_call.1} parent=5 // pred_region
        %s146 = ssub.s32 %s17, 1
        // Predicated region
        $region13: #{tpu_custom_call.1} parent=11 // pred_check
          %p147 = pneg %p64
        $region14: #{tpu_custom_call.1} parent=11 // pred_check_branch
          %149 = sbr.rel (%p147) target = $region16
        $region15: #{tpu_custom_call.1} parent=11 // pred_region
          %s151 = ssub.s32 256, 256
          %152 = vsyncadd [#allocation6], %s151
          %s153 = sshll.u32 [#allocation5], 4
          %s154 = int_to_ptr.vmem [resolvable:$true] %s153
          %159 = dma.hbm_to_vmem [thread:$0]  %s1, 256, %s154, [#allocation6], 128, 128, 8
        $region16: #{tpu_custom_call.1} parent=11 // pred_fallthru
          _
        // Predicated region
        $region17: #{tpu_custom_call.1} parent=11 // pred_check
          %p160 = pneg %p85
        $region18: #{tpu_custom_call.1} parent=11 // pred_check_branch
          %162 = sbr.rel (%p160) target = $region20
        $region19: #{tpu_custom_call.1} parent=11 // pred_region
          %s164 = ssub.s32 512, 512
          %165 = vsyncadd [#allocation6], %s164
          %s166 = sshll.u32 [#allocation7], 4
          %s167 = int_to_ptr.vmem [resolvable:$true] %s166
          %172 = dma.hbm_to_vmem [thread:$0]  %s2, 512, %s167, [#allocation6], 128, 128, 8
        $region20: #{tpu_custom_call.1} parent=11 // pred_fallthru
          _
        // Predicated region
        $region21: #{tpu_custom_call.1} parent=11 // pred_check
          %p173 = pneg %p106
        $region22: #{tpu_custom_call.1} parent=11 // pred_check_branch
          %175 = sbr.rel (%p173) target = $region24
        $region23: #{tpu_custom_call.1} parent=11 // pred_region
          _
        $region24: #{tpu_custom_call.1} parent=11 // pred_fallthru
          _
      $region12: #{tpu_custom_call.1} parent=5 // pred_fallthru
        _
      %p176 = scmp.lt.s32.totalorder %s17, 2
      // Predicated region
      $region25: #{tpu_custom_call.1} parent=5 // pred_check
        %p177 = pneg %p176
      $region26: #{tpu_custom_call.1} parent=5 // pred_check_branch
        %179 = sbr.rel (%p177) target = $region28
      $region27: #{tpu_custom_call.1} parent=5 // pred_region
        // Predicated region
        $region29: #{tpu_custom_call.1} parent=27 // pred_check
          %p180 = pneg %p37
        $region30: #{tpu_custom_call.1} parent=27 // pred_check_branch
          %182 = sbr.rel (%p180) target = $region32
        $region31: #{tpu_custom_call.1} parent=27 // pred_region
          %s183 = sand.u32 %s27, 1
          %s184 = scalar_lea.sflag [#allocation3], %s183
          %s185 = sand.u32 %s27, 1
          %s186 = smul.addr %s185, 16
          %s187 = scalar_lea.vmem [#allocation2], %s186
          %s189 = ssub.s32 256, 256
          %190 = vsyncadd %s184, %s189
          %s191 = smul.addr %s17, 2
          %s192 = smul.addr %s191, 128
          %s193 = scalar_lea.hbm %s0, %s192
          %s194 = sshll.u32 %s187, 4
          %s195 = int_to_ptr.vmem [resolvable:$true] %s194
          %200 = dma.hbm_to_vmem [thread:$0]  %s193, 256, %s195, %s184, 128, 128, 8
        $region32: #{tpu_custom_call.1} parent=27 // pred_fallthru
          _
      $region28: #{tpu_custom_call.1} parent=5 // pred_fallthru
        _
      %p201 = scmp.le.s32.totalorder 1, %s17
      %p202 = scmp.lt.s32.totalorder %s17, 3
      %p203 = pnand %p201, %p202
      %p204 = pneg %p203
      // Predicated region
      $region33: #{tpu_custom_call.1} parent=5 // pred_check
        _
      $region34: #{tpu_custom_call.1} parent=5 // pred_check_branch
        %206 = sbr.rel (%p203) target = $region36
      $region35: #{tpu_custom_call.1} parent=5 // pred_region
        %s207 = ssub.s32 %s17, 1
        %s208 = sand.u32 %s30, 1
        %s209 = scalar_lea.sflag [#allocation3], %s208
        %s210 = sand.u32 %s30, 1
        %s211 = smul.addr %s210, 16
        %s212 = scalar_lea.vmem [#allocation2], %s211
        // Predicated region
        $region37: #{tpu_custom_call.1} parent=35 // pred_check
          %p213 = pneg %p43
        $region38: #{tpu_custom_call.1} parent=35 // pred_check_branch
          %215 = sbr.rel (%p213) target = $region40
        $region39: #{tpu_custom_call.1} parent=35 // pred_region
          %216 = dma.done %s209, 256
        $region40: #{tpu_custom_call.1} parent=35 // pred_fallthru
          _
        // Predicated region
        $region41: #{tpu_custom_call.1} parent=35 // pred_check
          %p217 = pneg %p64
        $region42: #{tpu_custom_call.1} parent=35 // pred_check_branch
          %219 = sbr.rel (%p217) target = $region44
        $region43: #{tpu_custom_call.1} parent=35 // pred_region
          %220 = dma.done [#allocation6], 256
        $region44: #{tpu_custom_call.1} parent=35 // pred_fallthru
          _
        // Predicated region
        $region45: #{tpu_custom_call.1} parent=35 // pred_check
          %p221 = pneg %p85
        $region46: #{tpu_custom_call.1} parent=35 // pred_check_branch
          %223 = sbr.rel (%p221) target = $region48
        $region47: #{tpu_custom_call.1} parent=35 // pred_region
          %224 = dma.done [#allocation6], 512
        $region48: #{tpu_custom_call.1} parent=35 // pred_fallthru
          _
        %s225 = sand.u32 %s30, 1
        %s226 = scalar_lea.sflag [#allocation3], %s225
        %s227 = sand.u32 %s30, 1
        %s228 = smul.addr %s227, 16
        %s229 = scalar_lea.vmem [#allocation2], %s228
        %p230 = pneg %p43
        %p231 = pneg %p40
        %p232 = pneg %p64
        %p233 = pneg %p61
        %p234 = pneg %p85
        %p235 = pneg %p82
        %p236 = pneg %p106
        %p237 = pneg %p103
        %p238 = pneg %p132
        %p239 = pneg %p129
        %s240 = sand.u32 %s119, 1
        %s241 = scalar_lea.sflag [#allocation4], %s240
        %s242 = sand.u32 %s119, 1
        %s243 = smul.addr %s242, 16
        %s244 = scalar_lea.vmem [#allocation8], %s243
        %v245 = vld [vmem:[#allocation5] sm:$0xff]
        %v246 = vld [vmem:[#allocation5 + $0x8] sm:$0xff]
        %v247 = vld [vmem:[%s212] sm:$0xff]
        %v248 = vld [vmem:[%s212 + $0x8] sm:$0xff]
        %vm249 = vcmask 130048
        %v251 = vsel %vm249, %v245, 0
        %v254 = vsel %vm249, %v246, 0
        %256 = vmatprep.subr.mxu0 0.0
        %257 = vmatpush1.msra.mxu0 %v247
        %258 = vmatprep.subr.mxu0 0.0
        %259 = vmatpush1.msra.mxu0 %v248
        %260 = vmatprep.subr.mxu0 0.0
        %261 = vmatpush1.msra.mxu0 0.0
        %262 = vmatprep.subr.mxu0 0.0
        %263 = vmatpush1.msra.mxu0 0.0
        %264 = vmatprep.subr.mxu0 0.0
        %265 = vmatpush1.msra.mxu0 0.0
        %266 = vmatprep.subr.mxu0 0.0
        %267 = vmatpush1.msra.mxu0 0.0
        %268 = vmatprep.subr.mxu0 0.0
        %269 = vmatpush1.msra.mxu0 0.0
        %270 = vmatprep.subr.mxu0 0.0
        %271 = vmatpush1.msra.mxu0 0.0
        %272 = vmatprep.subr.mxu0 0.0
        %273 = vmatpush1.msra.mxu0 0.0
        %274 = vmatprep.subr.mxu0 0.0
        %275 = vmatpush1.msra.mxu0 0.0
        %276 = vmatprep.subr.mxu0 0.0
        %277 = vmatpush1.msra.mxu0 0.0
        %278 = vmatprep.subr.mxu0 0.0
        %279 = vmatpush1.msra.mxu0 0.0
        %280 = vmatprep.subr.mxu0 0.0
        %281 = vmatpush1.msra.mxu0 0.0
        %282 = vmatprep.subr.mxu0 0.0
        %283 = vmatpush1.msra.mxu0 0.0
        %284 = vmatprep.subr.mxu0 0.0
        %285 = vmatpush1.msra.mxu0 0.0
        %286 = vmatprep.subr.mxu0 0.0
        %287 = vmatpush1.msra.mxu0 0.0
        %288 = vmatprep.subr.mxu0 0.0
        %289 = vmatpush1.msra.mxu0 0.0
        %290 = vmatprep.subr.mxu0 0.0
        %291 = vmatpush1.msra.mxu0 0.0
        %292 = vmatprep.subr.mxu0 0.0
        %293 = vmatpush1.msra.mxu0 0.0
        %294 = vmatprep.subr.mxu0 0.0
        %295 = vmatpush1.msra.mxu0 0.0
        %296 = vmatprep.subr.mxu0 0.0
        %297 = vmatpush1.msra.mxu0 0.0
        %298 = vmatprep.subr.mxu0 0.0
        %299 = vmatpush1.msra.mxu0 0.0
        %300 = vmatprep.subr.mxu0 0.0
        %301 = vmatpush1.msra.mxu0 0.0
        %302 = vmatprep.subr.mxu0 0.0
        %303 = vmatpush1.msra.mxu0 0.0
        %304 = vmatprep.subr.mxu0 0.0
        %305 = vmatpush1.msra.mxu0 0.0
        %306 = vmatprep.subr.mxu0 0.0
        %307 = vmatpush1.msra.mxu0 0.0
        %308 = vmatprep.subr.mxu0 0.0
        %309 = vmatpush1.msra.mxu0 0.0
        %310 = vmatprep.subr.mxu0 0.0
        %311 = vmatpush1.msra.mxu0 0.0
        %312 = vmatprep.subr.mxu0 0.0
        %313 = vmatpush1.msra.mxu0 0.0
        %314 = vmatprep.subr.mxu0 0.0
        %315 = vmatpush1.msra.mxu0 0.0
        %316 = vmatprep.subr.mxu0 0.0
        %317 = vmatpush1.msra.mxu0 0.0
        %318 = vmatprep.subr.mxu0 0.0
        %319 = vmatpush1.msra.mxu0 0.0
        %320 = vmatprep.mubr.f32.mxu0 0.0
        %321 = vmatmul.mubr.f32.gmra.mrb[0].mxu0 %v251
        %v322 = vpop.f32.mrb[0].mxu0
        %v323 = vadd.f32 0.0, %v322
        %v324 = vpop.f32.mrb[0].mxu0
        %325 = vmatprep.mubr.f32.mxu0 0.0
        %326 = vmatmul.mubr.f32.gmra.mrb[0].mxu0 %v254
        %v327 = vpop.f32.mrb[0].mxu0
        %v328 = vadd.f32 0.0, %v327
        %v329 = vpop.f32.mrb[0].mxu0
        %330 = vdwg.mxu0
        %v331 = vld [vmem:[#allocation7] sm:$0xff]
        %v332 = vld [vmem:[#allocation7 + $0x8] sm:$0xff]
        %v333 = vld [vmem:[#allocation7 + $0x10] sm:$0xff]
        %v334 = vld [vmem:[#allocation7 + $0x18] sm:$0xff]
        %v335 = vld [vmem:[%s3] sm:$0x1]
        %v337 = vlaneseq
        %v338 = vshrl.u32 %v337, 7
        %v339 = vsub.s32 0, %v338
        %v340 = vrot.slane %v335, %v339
        %vm342 = vcmask 261120
        %v344 = vsel %vm342, %v323, 0
        %v347 = vsel %vm342, %v328, 0
        %349 = vmatprep.subr.mxu0 0.0
        %350 = vmatpush1.msra.mxu0 %v331
        %351 = vmatprep.subr.mxu0 0.0
        %352 = vmatpush1.msra.mxu0 %v332
        %353 = vmatprep.subr.mxu0 0.0
        %354 = vmatpush1.msra.mxu0 %v333
        %355 = vmatprep.subr.mxu0 0.0
        %356 = vmatpush1.msra.mxu0 %v334
        %357 = vmatprep.subr.mxu0 0.0
        %358 = vmatpush1.msra.mxu0 0.0
        %359 = vmatprep.subr.mxu0 0.0
        %360 = vmatpush1.msra.mxu0 0.0
        %361 = vmatprep.subr.mxu0 0.0
        %362 = vmatpush1.msra.mxu0 0.0
        %363 = vmatprep.subr.mxu0 0.0
        %364 = vmatpush1.msra.mxu0 0.0
        %365 = vmatprep.subr.mxu0 0.0
        %366 = vmatpush1.msra.mxu0 0.0
        %367 = vmatprep.subr.mxu0 0.0
        %368 = vmatpush1.msra.mxu0 0.0
        %369 = vmatprep.subr.mxu0 0.0
        %370 = vmatpush1.msra.mxu0 0.0
        %371 = vmatprep.subr.mxu0 0.0
        %372 = vmatpush1.msra.mxu0 0.0
        %373 = vmatprep.subr.mxu0 0.0
        %374 = vmatpush1.msra.mxu0 0.0
        %375 = vmatprep.subr.mxu0 0.0
        %376 = vmatpush1.msra.mxu0 0.0
        %377 = vmatprep.subr.mxu0 0.0
        %378 = vmatpush1.msra.mxu0 0.0
        %379 = vmatprep.subr.mxu0 0.0
        %380 = vmatpush1.msra.mxu0 0.0
        %381 = vmatprep.subr.mxu0 0.0
        %382 = vmatpush1.msra.mxu0 0.0
        %383 = vmatprep.subr.mxu0 0.0
        %384 = vmatpush1.msra.mxu0 0.0
        %385 = vmatprep.subr.mxu0 0.0
        %386 = vmatpush1.msra.mxu0 0.0
        %387 = vmatprep.subr.mxu0 0.0
        %388 = vmatpush1.msra.mxu0 0.0
        %389 = vmatprep.subr.mxu0 0.0
        %390 = vmatpush1.msra.mxu0 0.0
        %391 = vmatprep.subr.mxu0 0.0
        %392 = vmatpush1.msra.mxu0 0.0
        %393 = vmatprep.subr.mxu0 0.0
        %394 = vmatpush1.msra.mxu0 0.0
        %395 = vmatprep.subr.mxu0 0.0
        %396 = vmatpush1.msra.mxu0 0.0
        %397 = vmatprep.subr.mxu0 0.0
        %398 = vmatpush1.msra.mxu0 0.0
        %399 = vmatprep.subr.mxu0 0.0
        %400 = vmatpush1.msra.mxu0 0.0
        %401 = vmatprep.subr.mxu0 0.0
        %402 = vmatpush1.msra.mxu0 0.0
        %403 = vmatprep.subr.mxu0 0.0
        %404 = vmatpush1.msra.mxu0 0.0
        %405 = vmatprep.subr.mxu0 0.0
        %406 = vmatpush1.msra.mxu0 0.0
        %407 = vmatprep.subr.mxu0 0.0
        %408 = vmatpush1.msra.mxu0 0.0
        %409 = vmatprep.subr.mxu0 0.0
        %410 = vmatpush1.msra.mxu0 0.0
        %411 = vmatprep.subr.mxu0 0.0
        %412 = vmatpush1.msra.mxu0 0.0
        %413 = vmatprep.mubr.f32.mxu0 0.0
        %414 = vmatmul.mubr.f32.gmra.mrb[0].mxu0 %v344
        %v415 = vpop.f32.mrb[0].mxu0
        %v416 = vadd.f32 %v340, %v415
        %v417 = vpop.f32.mrb[0].mxu0
        %418 = vmatprep.mubr.f32.mxu0 0.0
        %419 = vmatmul.mubr.f32.gmra.mrb[0].mxu0 %v347
        %v420 = vpop.f32.mrb[0].mxu0
        %v421 = vadd.f32 %v340, %v420
        %v422 = vpop.f32.mrb[0].mxu0
        %423 = vdwg.mxu0
        %vm424 = vcmask 523264
        %425 = vst.msk [vmem:[%s244] sm:$0xff] %vm424, %v416
        %426 = vst.msk [vmem:[%s244 + $0x8] sm:$0xff] %vm424, %v421
        %s427 = sand.u32 %s119, 1
        %s428 = scalar_lea.sflag [#allocation4], %s427
        %s429 = sand.u32 %s119, 1
        %s430 = smul.addr %s429, 16
        %s431 = scalar_lea.vmem [#allocation8], %s430
        // Predicated region
        $region49: #{tpu_custom_call.1} parent=35 // pred_check
          %p432 = pneg %p129
        $region50: #{tpu_custom_call.1} parent=35 // pred_check_branch
          %434 = sbr.rel (%p432) target = $region52
        $region51: #{tpu_custom_call.1} parent=35 // pred_region
          %s436 = ssub.s32 256, 256
          %437 = vsyncadd %s428, %s436
          %s438 = smul.addr %s22, 2
          %s439 = smul.addr %s438, 128
          %s440 = scalar_lea.hbm %s4, %s439
          %s441 = sshll.u32 %s431, 4
          %s442 = int_to_ptr.vmem [resolvable:$true] %s441
          %447 = dma.vmem_to_hbm [thread:$0]  %s442, 256, %s440, %s428, 128, 128, 8
        $region52: #{tpu_custom_call.1} parent=35 // pred_fallthru
          _
      $region36: #{tpu_custom_call.1} parent=5 // pred_fallthru
        _
      %p448 = scmp.le.s32.totalorder 2, %s17
      // Predicated region
      $region53: #{tpu_custom_call.1} parent=5 // pred_check
        %p449 = pneg %p448
      $region54: #{tpu_custom_call.1} parent=5 // pred_check_branch
        %451 = sbr.rel (%p449) target = $region56
      $region55: #{tpu_custom_call.1} parent=5 // pred_region
        %s452 = ssub.s32 %s17, 2
        // Predicated region
        $region57: #{tpu_custom_call.1} parent=55 // pred_check
          %p453 = pneg %p135
        $region58: #{tpu_custom_call.1} parent=55 // pred_check_branch
          %455 = sbr.rel (%p453) target = $region60
        $region59: #{tpu_custom_call.1} parent=55 // pred_region
          %s456 = sand.u32 %s120, 1
          %s457 = scalar_lea.sflag [#allocation4], %s456
          %s458 = sand.u32 %s120, 1
          %s459 = smul.addr %s458, 16
          %s460 = scalar_lea.vmem [#allocation8], %s459
          %461 = dma.done %s457, 256
        $region60: #{tpu_custom_call.1} parent=55 // pred_fallthru
          _
      $region56: #{tpu_custom_call.1} parent=5 // pred_fallthru
        _
    $region6: #{tpu_custom_call.1} parent=1 // loop_footer
      %s21 = sadd.s32 1, %s17
    $region7: #{tpu_custom_call.1} parent=1 // loop_footer_branch
      %16 = sbr.rel target = $region3
    $region8: #{tpu_custom_call.1} parent=1 // loop_exit
      _
    %462 = vsyncpa [#allocation3], 1
    %s463 = scalar_lea.sflag [#allocation3], 1
    %464 = vsyncpa %s463, 1
    %465 = vsyncpa [#allocation6], 1
    %466 = vsyncpa [#allocation4], 1
    %s467 = scalar_lea.sflag [#allocation4], 1
    %468 = vsyncpa %s467, 1

</llo_original>
